<compile_context>
chip_gen: v6e
topology: v6e:2x2x1
jax: 0.10.0
libtpu: 0.0.40
codegen_flags: <defaults>
</compile_context>

<pallas_src>
import functools

import jax
import jax.numpy as jnp
from jax.experimental import pallas as pl
from jax.experimental.pallas import tpu as pltpu


def _round_up(n: int, m: int) -> int:
    return ((n + m - 1) // m) * m


def dqn_kernel(x_ref, w1_ref, b1_ref, w2_ref, b2_ref, out_ref):
    # Hidden layer: x @ W1 (MXU, f32 accumulate) + b1, ReLU (VPU, f32).
    a = x_ref[...].astype(w1_ref.dtype)
    h = jnp.dot(a, w1_ref[...], preferred_element_type=jnp.float32)
    h = jnp.maximum(h + b1_ref[...], 0.0)
    # Output layer: h @ W2 + b2 (real out_dim columns; masked stores are cheap
    # next to the DMA savings in this HBM-bound kernel).
    o = jnp.dot(h.astype(w2_ref.dtype), w2_ref[...],
                preferred_element_type=jnp.float32)
    out_ref[...] = (o + b2_ref[...]).astype(out_ref.dtype)


@functools.partial(jax.jit, static_argnames=("block_b",))
def dqn_forward(x, w1, b1, w2, b2, *, block_b: int | None = None):
    """DQN forward pass.

    x : (B, input_dim)            float32 (or bfloat16)
    w1: (input_dim, 128), b1: (128,)
    w2: (128, output_dim), b2: (output_dim,)
    w1/w2 may be float32 or bfloat16 (bias/activation math stays f32).
    """
    B, in_dim = x.shape
    hidden = w1.shape[1]
    out_dim = w2.shape[1]

    # Batch tile: multiple of 8 sublanes. For B > 8 aim for >= 2 grid steps so
    # both v7x TensorCores get work; cap at 2048 rows (tiny footprint with the
    # real in/out dims, comfortably double-buffered under v7x's 64 MiB VMEM).
    if block_b is None:
        if B <= 8:
            block_b = 8
        else:
            block_b = min(2048, _round_up(-(-B // 2), 8))
    block_b = max(8, _round_up(block_b, 8))
    grid_b = pl.cdiv(B, block_b)

    # Biases as (1, N) rows for broadcast inside the kernel (cheap reshapes).
    b1_2d = b1.astype(jnp.float32).reshape(1, hidden)
    b2_2d = b2.astype(jnp.float32).reshape(1, out_dim)

    wbytes = jnp.dtype(w1.dtype).itemsize
    xbytes = jnp.dtype(x.dtype).itemsize
    cost = pl.CostEstimate(
        flops=2 * B * (in_dim * hidden + hidden * out_dim),
        transcendentals=0,
        bytes_accessed=(B * in_dim * xbytes + B * out_dim * 4
                        + (w1.size + w2.size) * wbytes
                        + (b1_2d.size + b2_2d.size) * 4),
    )

    out = pl.pallas_call(
        dqn_kernel,
        out_shape=jax.ShapeDtypeStruct((B, out_dim), jnp.float32),
        grid=(grid_b,),
        in_specs=[
            # Activations: tiled over the batch (double-buffered by the pipeline).
            # Last block dim equals the full array dim -> no lane padding needed.
            pl.BlockSpec((block_b, in_dim), lambda i: (i, 0),
                         memory_space=pltpu.VMEM),
            # Weights / biases: full-extent blocks, constant index_map ->
            # VMEM-resident across batch tiles.
            pl.BlockSpec((in_dim, hidden), lambda i: (0, 0),
                         memory_space=pltpu.VMEM),
            pl.BlockSpec((1, hidden), lambda i: (0, 0),
                         memory_space=pltpu.VMEM),
            pl.BlockSpec((hidden, out_dim), lambda i: (0, 0),
                         memory_space=pltpu.VMEM),
            pl.BlockSpec((1, out_dim), lambda i: (0, 0),
                         memory_space=pltpu.VMEM),
        ],
        out_specs=pl.BlockSpec((block_b, out_dim), lambda i: (i, 0),
                               memory_space=pltpu.VMEM),
        compiler_params=pltpu.CompilerParams(
            # Batch axis is embarrassingly parallel -> megacore split on v7x.
            dimension_semantics=("parallel",),
        ),
        cost_estimate=cost,
    )(x, w1, b1_2d, w2, b2_2d)

    return out


def init_dqn_params(key, input_dim, output_dim, hidden=128, dtype=jnp.float32):
    """PyTorch-nn.Linear-style init: uniform(-1/sqrt(fan_in), 1/sqrt(fan_in)).

    Weights stored as (in_features, out_features) — the transpose of torch's layout.
    Pass dtype=jnp.bfloat16 for bf16 weight storage (biases stay f32); feeding
    bf16 activations as well halves the dominant x HBM stream if tolerance allows.
    """
    k1, k2, k3, k4 = jax.random.split(key, 4)
    bound1 = 1.0 / jnp.sqrt(input_dim)
    bound2 = 1.0 / jnp.sqrt(hidden)
    w1 = jax.random.uniform(k1, (input_dim, hidden), jnp.float32, -bound1, bound1)
    b1 = jax.random.uniform(k2, (hidden,), jnp.float32, -bound1, bound1)
    w2 = jax.random.uniform(k3, (hidden, output_dim), jnp.float32, -bound2, bound2)
    b2 = jax.random.uniform(k4, (output_dim,), jnp.float32, -bound2, bound2)
    return w1.astype(dtype), b1, w2.astype(dtype), b2


if __name__ == "__main__":
    key = jax.random.PRNGKey(0)
    kx, kp = jax.random.split(key)

    # Small shapes consistent with the module: DQN(input_dim=16, output_dim=4).
    batch, input_dim, output_dim = 8, 16, 4
    x = jax.random.normal(kx, (batch, input_dim), jnp.float32)
    w1, b1, w2, b2 = init_dqn_params(kp, input_dim, output_dim)  # f32: exact check

    out = dqn_forward(x, w1, b1, w2, b2)
    jax.block_until_ready(out)

    # Reference in plain JAX (same math as the PyTorch module).
    ref = jnp.maximum(x @ w1 + b1, 0.0) @ w2 + b2
    assert out.shape == (batch, output_dim)
    assert jnp.allclose(out, ref, atol=1e-5, rtol=1e-5)

    # Larger, batch-tiled case: B=1200 -> block_b=600, grid=(2,) (even split).
    big_b = 1200
    xb = jax.random.normal(jax.random.PRNGKey(1), (big_b, input_dim), jnp.float32)
    out_big = dqn_forward(xb, w1, b1, w2, b2)
    jax.block_until_ready(out_big)
    ref_big = jnp.maximum(xb @ w1 + b1, 0.0) @ w2 + b2
    assert out_big.shape == (big_b, output_dim)
    assert jnp.allclose(out_big, ref_big, atol=1e-4, rtol=1e-4)

    # Ragged last block: B=100 -> block_b=56, grid=(2,), last block partially OOB.
    # Safe because each output row depends only on its own input row and the OOB
    # output rows are masked on writeback.
    rag_b = 100
    xr = jax.random.normal(jax.random.PRNGKey(2), (rag_b, input_dim), jnp.float32)
    out_rag = dqn_forward(xr, w1, b1, w2, b2)
    jax.block_until_ready(out_rag)
    ref_rag = jnp.maximum(xr @ w1 + b1, 0.0) @ w2 + b2
    assert out_rag.shape == (rag_b, output_dim)
    assert jnp.allclose(out_rag, ref_rag, atol=1e-4, rtol=1e-4)

    print("KERNEL_OK")
</pallas_src>

<mosaic_0001>
module attributes {stable_mosaic.version = 11 : i64} {
  func.func @dqn_kernel(%arg0: i32, %arg1: memref<8x16xf32, #tpu.memory_space<vmem>>, %arg2: memref<16x128xf32, #tpu.memory_space<vmem>>, %arg3: memref<1x128xf32, #tpu.memory_space<vmem>>, %arg4: memref<128x4xf32, #tpu.memory_space<vmem>>, %arg5: memref<1x4xf32, #tpu.memory_space<vmem>>, %arg6: memref<8x4xf32, #tpu.memory_space<vmem>>) attributes {dimension_semantics = [#tpu.dimension_semantics<parallel>], iteration_bounds = array<i64: 1>, scalar_prefetch = 0 : i64, scratch_operands = 0 : i64, tpu.core_type = #tpu.core_type<tc>, window_params = [{transform_indices = @transform_0, window_bounds = array<i64: 8, 16>}, {pipeline_mode = #tpu.pipeline_mode<synchronous>, transform_indices = @transform_1, window_bounds = array<i64: 16, 128>}, {pipeline_mode = #tpu.pipeline_mode<synchronous>, transform_indices = @transform_2, window_bounds = array<i64: 1, 128>}, {pipeline_mode = #tpu.pipeline_mode<synchronous>, transform_indices = @transform_3, window_bounds = array<i64: 128, 4>}, {pipeline_mode = #tpu.pipeline_mode<synchronous>, transform_indices = @transform_4, window_bounds = array<i64: 1, 4>}, {transform_indices = @transform_5, window_bounds = array<i64: 8, 4>}]} {
    %c0 = arith.constant 0 : index
    %c0_0 = arith.constant 0 : index
    %0 = vector.load %arg1[%c0, %c0_0] : memref<8x16xf32, #tpu.memory_space<vmem>>, vector<8x16xf32>
    %c0_1 = arith.constant 0 : index
    %c0_2 = arith.constant 0 : index
    %1 = vector.load %arg2[%c0_1, %c0_2] : memref<16x128xf32, #tpu.memory_space<vmem>>, vector<16x128xf32>
    %cst = arith.constant dense<0.000000e+00> : vector<8x128xf32>
    %2 = tpu.matmul %0, %1, %cst {dimension_numbers = #tpu.dot_dimension_numbers<[1], [0], [0], [1], [0, 0, 1, 1], [], []>} : vector<8x16xf32>, vector<16x128xf32>, vector<8x128xf32> -> vector<8x128xf32>
    %c0_3 = arith.constant 0 : index
    %c0_4 = arith.constant 0 : index
    %3 = vector.load %arg3[%c0_3, %c0_4] : memref<1x128xf32, #tpu.memory_space<vmem>>, vector<1x128xf32>
    %4 = vector.broadcast %3 : vector<1x128xf32> to vector<8x128xf32>
    %5 = arith.addf %2, %4 : vector<8x128xf32>
    %cst_5 = arith.constant 0.000000e+00 : f32
    %6 = vector.broadcast %cst_5 : f32 to vector<8x128xf32>
    %7 = arith.maximumf %5, %6 : vector<8x128xf32>
    %c0_6 = arith.constant 0 : index
    %c0_7 = arith.constant 0 : index
    %8 = vector.load %arg4[%c0_6, %c0_7] : memref<128x4xf32, #tpu.memory_space<vmem>>, vector<128x4xf32>
    %cst_8 = arith.constant dense<0.000000e+00> : vector<8x4xf32>
    %9 = tpu.matmul %7, %8, %cst_8 {dimension_numbers = #tpu.dot_dimension_numbers<[1], [0], [0], [1], [0, 0, 1, 1], [], []>} : vector<8x128xf32>, vector<128x4xf32>, vector<8x4xf32> -> vector<8x4xf32>
    %c0_9 = arith.constant 0 : index
    %c0_10 = arith.constant 0 : index
    %10 = vector.load %arg5[%c0_9, %c0_10] : memref<1x4xf32, #tpu.memory_space<vmem>>, vector<1x4xf32>
    %11 = vector.broadcast %10 : vector<1x4xf32> to vector<8x4xf32>
    %12 = arith.addf %9, %11 : vector<8x4xf32>
    %c0_11 = arith.constant 0 : index
    %c0_12 = arith.constant 0 : index
    %13 = vector.load %arg6[%c0_11, %c0_12] : memref<8x4xf32, #tpu.memory_space<vmem>>, vector<8x4xf32>
    tpu.vector_store %arg6[%c0_11, %c0_12], %12 {strides = array<i32>} : memref<8x4xf32, #tpu.memory_space<vmem>>, vector<8x4xf32>,
    return
  }
  func.func @transform_0(%arg0: i32) -> (i32, i32) {
    %c0_i32 = arith.constant 0 : i32
    %c0_i32_0 = arith.constant 0 : i32
    return %arg0, %c0_i32 : i32, i32
  }
  func.func @transform_1(%arg0: i32) -> (i32, i32) {
    %c0_i32 = arith.constant 0 : i32
    %c0_i32_0 = arith.constant 0 : i32
    %c0_i32_1 = arith.constant 0 : i32
    return %c0_i32, %c0_i32_0 : i32, i32
  }
  func.func @transform_2(%arg0: i32) -> (i32, i32) {
    %c0_i32 = arith.constant 0 : i32
    %c0_i32_0 = arith.constant 0 : i32
    %c0_i32_1 = arith.constant 0 : i32
    return %c0_i32, %c0_i32_0 : i32, i32
  }
  func.func @transform_3(%arg0: i32) -> (i32, i32) {
    %c0_i32 = arith.constant 0 : i32
    %c0_i32_0 = arith.constant 0 : i32
    %c0_i32_1 = arith.constant 0 : i32
    return %c0_i32, %c0_i32_0 : i32, i32
  }
  func.func @transform_4(%arg0: i32) -> (i32, i32) {
    %c0_i32 = arith.constant 0 : i32
    %c0_i32_0 = arith.constant 0 : i32
    %c0_i32_1 = arith.constant 0 : i32
    return %c0_i32, %c0_i32_0 : i32, i32
  }
  func.func @transform_5(%arg0: i32) -> (i32, i32) {
    %c0_i32 = arith.constant 0 : i32
    %c0_i32_0 = arith.constant 0 : i32
    return %arg0, %c0_i32 : i32, i32
  }
}

</mosaic_0001>

<llo_original>
// kernel: dqn_forward.1
$region0: #{dqn_forward.1}
  #allocation0 [shape = 'u32[]', space=smem, size = 0x4, offset = 0x4, fixed_abs, tag = 'smem constant byte address 0x4 - core index']
  #allocation1 [shape = 'u32[144,128]{1,0:T(1,128)}', space=vmem, size = 0x12000, scoped, tag = 'internal scratch']
  %s0 = inlined_call_operand.vmem [shape: f32[8,16], index: 0, kind: input, shape index: {}]
  %s1 = inlined_call_operand.vmem [shape: f32[16,128], index: 1, kind: input, shape index: {}]
  %s2 = inlined_call_operand.vmem [shape: f32[1,128], index: 2, kind: input, shape index: {}]
  %s3 = inlined_call_operand.vmem [shape: f32[128,4], index: 3, kind: input, shape index: {}]
  %s4 = inlined_call_operand.vmem [shape: f32[1,4], index: 4, kind: input, shape index: {}]
  %s5 = inlined_call_operand.vmem [shape: f32[8,4], index: 5, kind: output, shape index: {}]
  %s6 = sld [smem:[#allocation0]]
  $region30: #{dqn_forward.1} parent=0
    _
  %s8 = ssub.s32 1, %s6
  %s9 = scalar_select 0, %s8, %s6
  // Predicated region
  $region2: #{dqn_forward.1} parent=0 // pred_check
    _
  $region3: #{dqn_forward.1} parent=0 // pred_check_branch
    %11 = sbr.rel (0) target = $region5
  $region4: #{dqn_forward.1} parent=0 // pred_region
    _
  $region5: #{dqn_forward.1} parent=0 // pred_fallthru
    _
  // Predicated region
  $region6: #{dqn_forward.1} parent=0 // pred_check
    _
  $region7: #{dqn_forward.1} parent=0 // pred_check_branch
    %13 = sbr.rel (0) target = $region9
  $region8: #{dqn_forward.1} parent=0 // pred_region
    _
  $region9: #{dqn_forward.1} parent=0 // pred_fallthru
    _
  // Predicated region
  $region10: #{dqn_forward.1} parent=0 // pred_check
    _
  $region11: #{dqn_forward.1} parent=0 // pred_check_branch
    %15 = sbr.rel (0) target = $region13
  $region12: #{dqn_forward.1} parent=0 // pred_region
    _
  $region13: #{dqn_forward.1} parent=0 // pred_fallthru
    _
  // Predicated region
  $region14: #{dqn_forward.1} parent=0 // pred_check
    _
  $region15: #{dqn_forward.1} parent=0 // pred_check_branch
    %17 = sbr.rel (0) target = $region17
  $region16: #{dqn_forward.1} parent=0 // pred_region
    _
  $region17: #{dqn_forward.1} parent=0 // pred_fallthru
    _
  // Predicated region
  $region18: #{dqn_forward.1} parent=0 // pred_check
    _
  $region19: #{dqn_forward.1} parent=0 // pred_check_branch
    %19 = sbr.rel (0) target = $region21
  $region20: #{dqn_forward.1} parent=0 // pred_region
    _
  $region21: #{dqn_forward.1} parent=0 // pred_fallthru
    _
  %v20 = vld [vmem:[%s0] sm:$0xff]
  %v21 = vld [vmem:[%s1] sm:$0xff]
  %v22 = vld [vmem:[%s1 + $0x8] sm:$0xff]
  %v23 = vld [vmem:[%s2] sm:$0x1]
  %v25 = vlaneseq
  %v26 = vshrl.u32 %v25, 7
  %v27 = vsub.s32 0, %v26
  %v28 = vrot.slane %v23, %v27
  %vm30 = vcmask 130048
  %v32 = vsel %vm30, %v20, 0
  %34 = vmatprep.subr.mxu0 0.0
  %35 = vmatpush1.msra.mxu0 0.0
  %36 = vmatprep.subr.mxu0 0.0
  %37 = vmatpush1.msra.mxu0 0.0
  %38 = vmatprep.subr.mxu0 0.0
  %39 = vmatpush1.msra.mxu0 0.0
  %40 = vmatprep.subr.mxu0 0.0
  %41 = vmatpush1.msra.mxu0 0.0
  %42 = vmatprep.subr.mxu0 0.0
  %43 = vmatpush1.msra.mxu0 0.0
  %44 = vmatprep.subr.mxu0 0.0
  %45 = vmatpush1.msra.mxu0 0.0
  %46 = vmatprep.subr.mxu0 0.0
  %47 = vmatpush1.msra.mxu0 0.0
  %48 = vmatprep.subr.mxu0 0.0
  %49 = vmatpush1.msra.mxu0 0.0
  %50 = vmatprep.subr.mxu0 0.0
  %51 = vmatpush1.msra.mxu0 0.0
  %52 = vmatprep.subr.mxu0 0.0
  %53 = vmatpush1.msra.mxu0 0.0
  %54 = vmatprep.subr.mxu0 0.0
  %55 = vmatpush1.msra.mxu0 0.0
  %56 = vmatprep.subr.mxu0 0.0
  %57 = vmatpush1.msra.mxu0 0.0
  %58 = vmatprep.subr.mxu0 0.0
  %59 = vmatpush1.msra.mxu0 0.0
  %60 = vmatprep.subr.mxu0 0.0
  %61 = vmatpush1.msra.mxu0 0.0
  %62 = vmatprep.subr.mxu0 0.0
  %63 = vmatpush1.msra.mxu0 %v22
  %64 = vmatprep.subr.mxu0 0.0
  %65 = vmatpush1.msra.mxu0 %v21
  %66 = vmatprep.subr.mxu0 0.0
  %67 = vmatpush2.msra.mxu0 0.0
  %68 = vmatprep.subr.mxu0 0.0
  %69 = vmatpush2.msra.mxu0 0.0
  %70 = vmatprep.subr.mxu0 0.0
  %71 = vmatpush2.msra.mxu0 0.0
  %72 = vmatprep.subr.mxu0 0.0
  %73 = vmatpush2.msra.mxu0 0.0
  %74 = vmatprep.subr.mxu0 0.0
  %75 = vmatpush2.msra.mxu0 0.0
  %76 = vmatprep.subr.mxu0 0.0
  %77 = vmatpush2.msra.mxu0 0.0
  %78 = vmatprep.subr.mxu0 0.0
  %79 = vmatpush2.msra.mxu0 0.0
  %80 = vmatprep.subr.mxu0 0.0
  %81 = vmatpush2.msra.mxu0 0.0
  %82 = vmatprep.subr.mxu0 0.0
  %83 = vmatpush2.msra.mxu0 0.0
  %84 = vmatprep.subr.mxu0 0.0
  %85 = vmatpush2.msra.mxu0 0.0
  %86 = vmatprep.subr.mxu0 0.0
  %87 = vmatpush2.msra.mxu0 0.0
  %88 = vmatprep.subr.mxu0 0.0
  %89 = vmatpush2.msra.mxu0 0.0
  %90 = vmatprep.subr.mxu0 0.0
  %91 = vmatpush2.msra.mxu0 0.0
  %92 = vmatprep.subr.mxu0 0.0
  %93 = vmatpush2.msra.mxu0 0.0
  %94 = vmatprep.subr.mxu0 0.0
  %95 = vmatpush2.msra.mxu0 0.0
  %96 = vmatprep.subr.mxu0 0.0
  %97 = vmatpush2.msra.mxu0 0.0
  %98 = vmatprep.mubr.f32.mxu0 0.0
  %99 = vmatmul.mubr.f32.gmra.mxu0 %v32
  %v100 = vpop.f32.mrf.mxu0
  %v101 = vadd.f32 %v28, %v100
  %v102 = vpop.f32.mrf.mxu0
  %103 = vdwg.mxu0
  %v104 = vmax.f32 %v101, 0.0
  %v105 = vld [vmem:[%s3] sm:$0xff]
  %v106 = vld [vmem:[%s3 + $0x8] sm:$0xff]
  %v107 = vld [vmem:[%s3 + $0x10] sm:$0xff]
  %v108 = vld [vmem:[%s3 + $0x18] sm:$0xff]
  %v109 = vld [vmem:[%s3 + $0x20] sm:$0xff]
  %v110 = vld [vmem:[%s3 + $0x28] sm:$0xff]
  %v111 = vld [vmem:[%s3 + $0x30] sm:$0xff]
  %v112 = vld [vmem:[%s3 + $0x38] sm:$0xff]
  %v113 = vld [vmem:[%s3 + $0x40] sm:$0xff]
  %v114 = vld [vmem:[%s3 + $0x48] sm:$0xff]
  %v115 = vld [vmem:[%s3 + $0x50] sm:$0xff]
  %v116 = vld [vmem:[%s3 + $0x58] sm:$0xff]
  %v117 = vld [vmem:[%s3 + $0x60] sm:$0xff]
  %v118 = vld [vmem:[%s3 + $0x68] sm:$0xff]
  %v119 = vld [vmem:[%s3 + $0x70] sm:$0xff]
  %v120 = vld [vmem:[%s3 + $0x78] sm:$0xff]
  %v121 = vld [vmem:[%s4] sm:$0x1]
  %v123 = vlaneseq
  %v124 = vshrl.u32 %v123, 7
  %v125 = vsub.s32 0, %v124
  %v126 = vrot.slane %v121, %v125
  %128 = vmatprep.subr.mxu0 0.0
  %129 = vmatpush1.msra.mxu0 %v120
  %130 = vmatprep.subr.mxu0 0.0
  %131 = vmatpush1.msra.mxu0 %v119
  %132 = vmatprep.subr.mxu0 0.0
  %133 = vmatpush1.msra.mxu0 %v118
  %134 = vmatprep.subr.mxu0 0.0
  %135 = vmatpush1.msra.mxu0 %v117
  %136 = vmatprep.subr.mxu0 0.0
  %137 = vmatpush1.msra.mxu0 %v116
  %138 = vmatprep.subr.mxu0 0.0
  %139 = vmatpush1.msra.mxu0 %v115
  %140 = vmatprep.subr.mxu0 0.0
  %141 = vmatpush1.msra.mxu0 %v114
  %142 = vmatprep.subr.mxu0 0.0
  %143 = vmatpush1.msra.mxu0 %v113
  %144 = vmatprep.subr.mxu0 0.0
  %145 = vmatpush1.msra.mxu0 %v112
  %146 = vmatprep.subr.mxu0 0.0
  %147 = vmatpush1.msra.mxu0 %v111
  %148 = vmatprep.subr.mxu0 0.0
  %149 = vmatpush1.msra.mxu0 %v110
  %150 = vmatprep.subr.mxu0 0.0
  %151 = vmatpush1.msra.mxu0 %v109
  %152 = vmatprep.subr.mxu0 0.0
  %153 = vmatpush1.msra.mxu0 %v108
  %154 = vmatprep.subr.mxu0 0.0
  %155 = vmatpush1.msra.mxu0 %v107
  %156 = vmatprep.subr.mxu0 0.0
  %157 = vmatpush1.msra.mxu0 %v106
  %158 = vmatprep.subr.mxu0 0.0
  %159 = vmatpush1.msra.mxu0 %v105
  %160 = vmatprep.subr.mxu0 0.0
  %161 = vmatpush2.msra.mxu0 0.0
  %162 = vmatprep.subr.mxu0 0.0
  %163 = vmatpush2.msra.mxu0 0.0
  %164 = vmatprep.subr.mxu0 0.0
  %165 = vmatpush2.msra.mxu0 0.0
  %166 = vmatprep.subr.mxu0 0.0
  %167 = vmatpush2.msra.mxu0 0.0
  %168 = vmatprep.subr.mxu0 0.0
  %169 = vmatpush2.msra.mxu0 0.0
  %170 = vmatprep.subr.mxu0 0.0
  %171 = vmatpush2.msra.mxu0 0.0
  %172 = vmatprep.subr.mxu0 0.0
  %173 = vmatpush2.msra.mxu0 0.0
  %174 = vmatprep.subr.mxu0 0.0
  %175 = vmatpush2.msra.mxu0 0.0
  %176 = vmatprep.subr.mxu0 0.0
  %177 = vmatpush2.msra.mxu0 0.0
  %178 = vmatprep.subr.mxu0 0.0
  %179 = vmatpush2.msra.mxu0 0.0
  %180 = vmatprep.subr.mxu0 0.0
  %181 = vmatpush2.msra.mxu0 0.0
  %182 = vmatprep.subr.mxu0 0.0
  %183 = vmatpush2.msra.mxu0 0.0
  %184 = vmatprep.subr.mxu0 0.0
  %185 = vmatpush2.msra.mxu0 0.0
  %186 = vmatprep.subr.mxu0 0.0
  %187 = vmatpush2.msra.mxu0 0.0
  %188 = vmatprep.subr.mxu0 0.0
  %189 = vmatpush2.msra.mxu0 0.0
  %190 = vmatprep.subr.mxu0 0.0
  %191 = vmatpush2.msra.mxu0 0.0
  %192 = vmatprep.mubr.f32.mxu0 0.0
  %193 = vmatmul.mubr.f32.gmra.mxu0 %v104
  %v194 = vpop.f32.mrf.mxu0
  %v195 = vadd.f32 %v126, %v194
  %v196 = vpop.f32.mrf.mxu0
  %197 = vdwg.mxu0
  %vm198 = vcmask 31744
  %199 = vst.msk [vmem:[%s5] sm:$0xff] %vm198, %v195
  // Predicated region
  $region22: #{dqn_forward.1} parent=0 // pred_check
    _
  $region23: #{dqn_forward.1} parent=0 // pred_check_branch
    %201 = sbr.rel (0) target = $region25
  $region24: #{dqn_forward.1} parent=0 // pred_region
    _
  $region25: #{dqn_forward.1} parent=0 // pred_fallthru
    _
  // Predicated region
  $region26: #{dqn_forward.1} parent=0 // pred_check
    _
  $region27: #{dqn_forward.1} parent=0 // pred_check_branch
    %203 = sbr.rel (0) target = $region29
  $region28: #{dqn_forward.1} parent=0 // pred_region
    _
  $region29: #{dqn_forward.1} parent=0 // pred_fallthru
    _

</llo_original>
